<compile_context>
chip_gen: v7x
topology: tpu7x:2x2x1
jax: 0.10.0
libtpu: 0.0.40
codegen_flags: <defaults>
</compile_context>

<pallas_src>
import jax
import jax.numpy as jnp
import numpy as np
from jax import lax
from jax.experimental import pallas as pl
from jax.experimental.pallas import tpu as pltpu

LN_EPS = 1e-5  # nn.LayerNorm default eps


def _cdiv(a, b):
    return -(-a // b)


def _layer_norm(x, gamma, beta):
    mu = jnp.mean(x, axis=-1, keepdims=True)
    xc = x - mu
    var = jnp.mean(xc * xc, axis=-1, keepdims=True)
    return xc * lax.rsqrt(var + LN_EPS) * gamma + beta


# ---------------------------------------------------------------------------------
# stage 1: fused K/V projection (hoisted out of the flash kv loop)
# ---------------------------------------------------------------------------------
def _kv_proj_kernel(x_ref, wkv_ref, bkv_ref, kt_ref, v_ref):
    d_model = x_ref.shape[-1]
    xb = x_ref[0].astype(jnp.bfloat16)
    kv = jnp.dot(xb, wkv_ref[...], preferred_element_type=jnp.float32) + bkv_ref[...]
    k = kv[:, :d_model]
    v = kv[:, d_model:]
    # Store K pre-transposed ([D, tile]) so the flash loop does a plain MXU matmul.
    kt_ref[0] = jnp.transpose(k).astype(jnp.bfloat16)
    v_ref[0] = v.astype(jnp.bfloat16)


# ---------------------------------------------------------------------------------
# stage 2: flash attention + out-proj + residual + norm1
# ---------------------------------------------------------------------------------
def _make_attn_kernel(tkv, s_valid, need_mask):
    def kernel(xq_ref, kt_ref, v_ref,
               wq_ref, bq_ref, wo_ref, bo_ref, g1_ref, be1_ref,
               x1_ref,
               q_sc, m_sc, l_sc, acc_sc):
        ki = pl.program_id(2)

        # ---- first kv step: project Q (scale folded into wq/bq), init softmax state
        @pl.when(ki == 0)
        def _():
            xq = xq_ref[0].astype(jnp.bfloat16)
            q = jnp.dot(xq, wq_ref[...], preferred_element_type=jnp.float32) + bq_ref[...]
            q_sc[...] = q.astype(jnp.bfloat16)
            m_sc[...] = jnp.full_like(m_sc, -jnp.inf)
            l_sc[...] = jnp.zeros_like(l_sc)
            acc_sc[...] = jnp.zeros_like(acc_sc)

        kt = kt_ref[0]                      # [D, tkv] bf16 (pre-projected, pre-transposed)
        v = v_ref[0]                        # [tkv, D] bf16

        s = jnp.dot(q_sc[...], kt, preferred_element_type=jnp.float32)   # [tq, tkv]
        if need_mask:                       # static: only emitted when S was padded
            col = ki * tkv + lax.broadcasted_iota(jnp.int32, s.shape, 1)
            s = jnp.where(col < s_valid, s, -jnp.inf)

        # ---- online softmax update (flash attention) ----
        m_new = jnp.maximum(m_sc[...], jnp.max(s, axis=-1, keepdims=True))
        alpha = jnp.exp(m_sc[...] - m_new)
        p = jnp.exp(s - m_new)
        l_sc[...] = alpha * l_sc[...] + jnp.sum(p, axis=-1, keepdims=True)
        acc_sc[...] = alpha * acc_sc[...] + jnp.dot(
            p.astype(jnp.bfloat16), v, preferred_element_type=jnp.float32)
        m_sc[...] = m_new

        # ---- last kv step: out-proj + residual + norm1 ----
        @pl.when(ki == pl.num_programs(2) - 1)
        def _():
            xq = xq_ref[0].astype(jnp.float32)
            # Exact reciprocal: runs once per q tile, negligible cost, tighter accuracy.
            attn = acc_sc[...] / l_sc[...]
            attn = jnp.dot(attn.astype(jnp.bfloat16), wo_ref[...],
                           preferred_element_type=jnp.float32) + bo_ref[...]
            x1 = _layer_norm(xq + attn, g1_ref[...], be1_ref[...])
            x1_ref[0] = x1.astype(x1_ref.dtype)

    return kernel


# ---------------------------------------------------------------------------------
# stage 3: pointwise FFN (1x1 convs) + residual + norm2
# ---------------------------------------------------------------------------------
def _ffn_kernel(x1_ref, w1_ref, b1_ref, w2_ref, b2_ref, g2_ref, be2_ref, out_ref):
    x1 = x1_ref[0]
    h = jnp.dot(x1.astype(jnp.bfloat16), w1_ref[...],
                preferred_element_type=jnp.float32) + b1_ref[...]
    h = jnp.maximum(h, 0.0)                                   # relu
    y = jnp.dot(h.astype(jnp.bfloat16), w2_ref[...],
                preferred_element_type=jnp.float32) + b2_ref[...]
    out_ref[0] = _layer_norm(x1 + y, g2_ref[...], be2_ref[...]).astype(out_ref.dtype)


# ---------------------------------------------------------------------------------
# glue: tiling, per-chip VMEM budgeting, parameter prep
# ---------------------------------------------------------------------------------
def _const_spec(shape):
    nd = len(shape)

    def idx(*_args, _nd=nd):
        return (0,) * _nd

    return pl.BlockSpec(shape, idx)


def _vmem_capacity_bytes():
    """Per-core VMEM capacity; conservative (v7x, 64 MiB) if the query is unavailable."""
    try:
        return int(pltpu.get_tpu_info().vmem_capacity_bytes)
    except Exception:
        return 64 << 20


def _attn_vmem_bytes(tq, tkv, D):
    f4, b2 = 4, 2
    io = 2 * 2 * tq * D * f4                       # xq in + x1 out, double-buffered
    kv = 2 * 2 * tkv * D * b2                      # K^T + V tiles, double-buffered bf16
    w = 2 * (2 * D * D * b2) + 8 * D * f4          # wq/wo (x2 bufs) + biases + LN params
    sc = tq * D * b2 + 2 * tq * f4 + tq * D * f4   # q_sc, m, l, acc
    tmp = 6 * tq * tkv * f4 + 4 * tq * D * f4      # score/prob temporaries + epilogue
    return io + kv + w + sc + tmp


def _ffn_vmem_bytes(t, D, d_ff):
    f4, b2 = 4, 2
    io = 2 * 2 * t * D * f4                        # x1 in + out, double-buffered
    w = 2 * 2 * D * d_ff * b2 + (d_ff + 4 * D) * f4
    tmp = 3 * t * d_ff * f4 + 4 * t * D * f4
    return io + w + tmp


def _pick_tiles(S, D, d_ff, B, cap):
    """tkv fixed at 128/256 (MXU width); tq grown to the per-chip VMEM budget."""
    budget = (cap * 5 // 8) * 4 // 5               # ~80% of the scoped limit we request
    tkv = 256 if S >= 256 else 128
    n0 = _cdiv(S, tkv)
    tq = tkv
    for g in (8, 6, 4, 3, 2):                      # only g that add no extra padding
        if n0 % g != 0:
            continue
        if B * (n0 // g) < 2 and B * n0 >= 2:      # keep >=2 parallel units (megacore)
            continue
        if _attn_vmem_bytes(g * tkv, tkv, D) <= budget:
            tq = g * tkv
            break
    S_pad = _cdiv(S, tq) * tq                      # multiple of both tq and tkv
    t_ffn = tq if _ffn_vmem_bytes(tq, D, d_ff) <= budget else tkv
    return tq, tkv, t_ffn, S_pad


def _prep_params(params, d_model):
    """Fold attention scale into Q, fuse K/V weights, cast matmul weights to bf16."""
    scale = 1.0 / np.sqrt(d_model)
    bf16, f32 = jnp.bfloat16, jnp.float32
    return {
        "wq": (params["wq"] * scale).astype(bf16),
        "bq": (params["bq"] * scale).astype(f32),
        "wkv": jnp.concatenate([params["wk"], params["wv"]], axis=1).astype(bf16),
        "bkv": jnp.concatenate([params["bk"], params["bv"]], axis=1).astype(f32),
        "wo": params["wo"].astype(bf16), "bo": params["bo"].astype(f32),
        "g1": params["g1"].astype(f32), "be1": params["be1"].astype(f32),
        "w1": params["w1"].astype(bf16), "b1": params["b1"].astype(f32),
        "w2": params["w2"].astype(bf16), "b2": params["b2"].astype(f32),
        "g2": params["g2"].astype(f32), "be2": params["be2"].astype(f32),
    }


def polla_encoder_layer(x, params):
    """x: [B, L, N, D] float32 -> [B, L, N, D] float32."""
    B, L, N, D = x.shape
    S = L * N
    d_ff = params["w1"].shape[1]

    cap = _vmem_capacity_bytes()
    vmem_limit = int(cap * 5 // 8)                 # ~40 MiB on v7x, ~80 MiB on v5e/v6e
    tq, tkv, t_ffn, S_pad = _pick_tiles(S, D, d_ff, B, cap)
    need_mask = S_pad != S

    x_flat = x.reshape(B, S, D).astype(jnp.float32)
    if need_mask:
        x_flat = jnp.pad(x_flat, ((0, 0), (0, S_pad - S), (0, 0)))

    kp = _prep_params(params, D)

    # ---- stage 1: K/V projection, hoisted out of the flash kv loop ----------------
    kt, v = pl.pallas_call(
        _kv_proj_kernel,
        out_shape=(jax.ShapeDtypeStruct((B, D, S_pad), jnp.bfloat16),
                   jax.ShapeDtypeStruct((B, S_pad, D), jnp.bfloat16)),
        grid=(B, S_pad // tkv),
        in_specs=[pl.BlockSpec((1, tkv, D), lambda b, i: (b, i, 0)),
                  _const_spec(kp["wkv"].shape),
                  _const_spec(kp["bkv"].shape)],
        out_specs=(pl.BlockSpec((1, D, tkv), lambda b, i: (b, 0, i)),
                   pl.BlockSpec((1, tkv, D), lambda b, i: (b, i, 0))),
        compiler_params=pltpu.CompilerParams(
            dimension_semantics=("parallel", "parallel"),
            vmem_limit_bytes=vmem_limit),
    )(x_flat, kp["wkv"], kp["bkv"])

    # ---- stage 2: flash attention + out-proj + residual + norm1 -------------------
    attn_weights = [kp[k] for k in ("wq", "bq", "wo", "bo", "g1", "be1")]
    x1 = pl.pallas_call(
        _make_attn_kernel(tkv, S, need_mask),
        out_shape=jax.ShapeDtypeStruct((B, S_pad, D), jnp.float32),
        grid=(B, S_pad // tq, S_pad // tkv),
        in_specs=[pl.BlockSpec((1, tq, D), lambda b, qi, ki: (b, qi, 0)),
                  pl.BlockSpec((1, D, tkv), lambda b, qi, ki: (b, 0, ki)),
                  pl.BlockSpec((1, tkv, D), lambda b, qi, ki: (b, ki, 0))]
                 + [_const_spec(w.shape) for w in attn_weights],
        out_specs=pl.BlockSpec((1, tq, D), lambda b, qi, ki: (b, qi, 0)),
        scratch_shapes=[
            pltpu.VMEM((tq, D), jnp.bfloat16),   # projected Q tile
            pltpu.VMEM((tq, 1), jnp.float32),    # running row max
            pltpu.VMEM((tq, 1), jnp.float32),    # running denominator
            pltpu.VMEM((tq, D), jnp.float32),    # output accumulator
        ],
        compiler_params=pltpu.CompilerParams(
            dimension_semantics=("parallel", "parallel", "arbitrary"),
            vmem_limit_bytes=vmem_limit),
    )(x_flat, kt, v, *attn_weights)

    # ---- stage 3: pointwise FFN + residual + norm2 (own kernel, own tiling) --------
    ffn_weights = [kp[k] for k in ("w1", "b1", "w2", "b2", "g2", "be2")]
    out = pl.pallas_call(
        _ffn_kernel,
        out_shape=jax.ShapeDtypeStruct((B, S_pad, D), x.dtype),
        grid=(B, S_pad // t_ffn),
        in_specs=[pl.BlockSpec((1, t_ffn, D), lambda b, i: (b, i, 0))]
                 + [_const_spec(w.shape) for w in ffn_weights],
        out_specs=pl.BlockSpec((1, t_ffn, D), lambda b, i: (b, i, 0)),
        compiler_params=pltpu.CompilerParams(
            dimension_semantics=("parallel", "parallel"),
            vmem_limit_bytes=vmem_limit),
    )(x1, *ffn_weights)

    if need_mask:
        out = out[:, :S]
    return out.reshape(B, L, N, D)


# ---------------------------------------------------------------------------------
# parameters & pure-JAX reference
# ---------------------------------------------------------------------------------
def init_params(key, d_model, d_ff):
    ks = jax.random.split(key, 12)
    f32 = jnp.float32

    def lin_w(k, din, dout):
        return (jax.random.normal(k, (din, dout), f32) / np.sqrt(din)).astype(f32)

    params = {
        "wq": lin_w(ks[0], d_model, d_model),
        "bq": 0.01 * jax.random.normal(ks[1], (1, d_model), f32),
        "wk": lin_w(ks[2], d_model, d_model),
        "bk": 0.01 * jax.random.normal(ks[3], (1, d_model), f32),
        "wv": lin_w(ks[4], d_model, d_model),
        "bv": 0.01 * jax.random.normal(ks[5], (1, d_model), f32),
        "wo": lin_w(ks[6], d_model, d_model),
        "bo": 0.01 * jax.random.normal(ks[7], (1, d_model), f32),
        "g1": jnp.ones((1, d_model), f32),
        "be1": jnp.zeros((1, d_model), f32),
        "g2": jnp.ones((1, d_model), f32),
        "be2": jnp.zeros((1, d_model), f32),
    }

    # Conv1d weights are (out_ch, in_ch, 1, 1); squeeze + transpose -> matmul form.
    conv1_w = (jax.random.normal(ks[8], (d_ff, d_model, 1, 1), f32)
               / np.sqrt(d_model)).astype(f32)
    conv1_b = 0.01 * jax.random.normal(ks[9], (d_ff,), f32)
    conv2_w = (jax.random.normal(ks[10], (d_model, d_ff, 1, 1), f32)
               / np.sqrt(d_ff)).astype(f32)
    conv2_b = 0.01 * jax.random.normal(ks[11], (d_model,), f32)
    params["w1"] = conv1_w[:, :, 0, 0].T          # [d_model, d_ff]
    params["b1"] = conv1_b.reshape(1, d_ff)
    params["w2"] = conv2_w[:, :, 0, 0].T          # [d_ff, d_model]
    params["b2"] = conv2_b.reshape(1, d_model)
    return params


def reference(x, params):
    """Pure-JAX f32 reference of the same forward pass (for correctness check)."""
    B, L, N, D = x.shape
    xf = x.reshape(B, L * N, D).astype(jnp.float32)

    def ln(v, g, b):
        mu = jnp.mean(v, axis=-1, keepdims=True)
        var = jnp.mean((v - mu) ** 2, axis=-1, keepdims=True)
        return (v - mu) / jnp.sqrt(var + LN_EPS) * g + b

    q = xf @ params["wq"] + params["bq"]
    k = xf @ params["wk"] + params["bk"]
    v = xf @ params["wv"] + params["bv"]
    s = jnp.einsum("bsd,btd->bst", q, k) / np.sqrt(D)
    p = jax.nn.softmax(s, axis=-1)
    a = jnp.einsum("bst,btd->bsd", p, v) @ params["wo"] + params["bo"]
    x1 = ln(xf + a, params["g1"], params["be1"])
    h = jax.nn.relu(x1 @ params["w1"] + params["b1"])
    y = h @ params["w2"] + params["b2"]
    out = ln(x1 + y, params["g2"], params["be2"])
    return out.reshape(B, L, N, D)


if __name__ == "__main__":
    # S = L*N = 320 -> padded to 512: exercises multi-kv-tile online softmax AND
    # the padded-key masking path; d_model = 128 keeps all tiles lane-dense.
    B, L, N, d_model = 2, 20, 16, 128
    d_ff = 64

    key = jax.random.PRNGKey(0)
    kx, kp = jax.random.split(key)
    x = jax.random.normal(kx, (B, L, N, d_model), jnp.float32)
    params = init_params(kp, d_model, d_ff)

    out = jax.block_until_ready(polla_encoder_layer(x, params))
    ref = jax.block_until_ready(reference(x, params))
    assert out.shape == (B, L, N, d_model)
    # bf16 matmul operands (f32 accumulation) -> slightly wider tolerance than pure f32.
    np.testing.assert_allclose(np.asarray(out), np.asarray(ref),
                               rtol=3e-2, atol=3e-2)
    print("KERNEL_OK")
</pallas_src>

<mosaic_0001>
module attributes {stable_mosaic.version = 11 : i64} {
  func.func @_kv_proj_kernel(%arg0: i32, %arg1: i32, %arg2: memref<1x256x128xf32, #tpu.memory_space<vmem>>, %arg3: memref<128x256xbf16, #tpu.memory_space<vmem>>, %arg4: memref<1x256xf32, #tpu.memory_space<vmem>>, %arg5: memref<1x128x256xbf16, #tpu.memory_space<vmem>>, %arg6: memref<1x256x128xbf16, #tpu.memory_space<vmem>>) attributes {dimension_semantics = [#tpu.dimension_semantics<parallel>, #tpu.dimension_semantics<parallel>], iteration_bounds = array<i64: 2, 2>, scalar_prefetch = 0 : i64, scratch_operands = 0 : i64, tpu.core_type = #tpu.core_type<tc>, window_params = [{transform_indices = @transform_0, window_bounds = array<i64: 1, 256, 128>}, {pipeline_mode = #tpu.pipeline_mode<synchronous>, transform_indices = @transform_1, window_bounds = array<i64: 128, 256>}, {pipeline_mode = #tpu.pipeline_mode<synchronous>, transform_indices = @transform_2, window_bounds = array<i64: 1, 256>}, {transform_indices = @transform_3, window_bounds = array<i64: 1, 128, 256>}, {transform_indices = @transform_4, window_bounds = array<i64: 1, 256, 128>}]} {
    %c0 = arith.constant 0 : index
    %c0_0 = arith.constant 0 : index
    %c0_1 = arith.constant 0 : index
    %0 = vector.load %arg2[%c0, %c0_0, %c0_1] : memref<1x256x128xf32, #tpu.memory_space<vmem>>, vector<1x256x128xf32>
    %1 = vector.shape_cast %0 : vector<1x256x128xf32> to vector<256x128xf32>
    %2 = arith.truncf %1 : vector<256x128xf32> to vector<256x128xbf16>
    %c0_2 = arith.constant 0 : index
    %c0_3 = arith.constant 0 : index
    %3 = vector.load %arg3[%c0_2, %c0_3] : memref<128x256xbf16, #tpu.memory_space<vmem>>, vector<128x256xbf16>
    %cst = arith.constant dense<0.000000e+00> : vector<256x256xf32>
    %4 = tpu.matmul %2, %3, %cst {dimension_numbers = #tpu.dot_dimension_numbers<[1], [0], [0], [1], [0, 0, 1, 1], [], []>} : vector<256x128xbf16>, vector<128x256xbf16>, vector<256x256xf32> -> vector<256x256xf32>
    %c0_4 = arith.constant 0 : index
    %c0_5 = arith.constant 0 : index
    %5 = vector.load %arg4[%c0_4, %c0_5] : memref<1x256xf32, #tpu.memory_space<vmem>>, vector<1x256xf32>
    %6 = vector.broadcast %5 : vector<1x256xf32> to vector<256x256xf32>
    %7 = arith.addf %4, %6 : vector<256x256xf32>
    %8 = vector.extract_strided_slice %7 {offsets = [0, 0], sizes = [256, 128], strides = [1, 1]} : vector<256x256xf32> to vector<256x128xf32>
    %9 = vector.extract_strided_slice %7 {offsets = [0, 128], sizes = [256, 128], strides = [1, 1]} : vector<256x256xf32> to vector<256x128xf32>
    %10 = tpu.transpose %8, [1, 0] : vector<256x128xf32> -> vector<128x256xf32>
    %11 = arith.truncf %10 : vector<128x256xf32> to vector<128x256xbf16>
    %c0_6 = arith.constant 0 : index
    %c0_7 = arith.constant 0 : index
    %c0_8 = arith.constant 0 : index
    %12 = vector.load %arg5[%c0_6, %c0_7, %c0_8] : memref<1x128x256xbf16, #tpu.memory_space<vmem>>, vector<1x128x256xbf16>
    %13 = vector.shape_cast %12 : vector<1x128x256xbf16> to vector<128x256xbf16>
    %14 = vector.shape_cast %11 : vector<128x256xbf16> to vector<1x128x256xbf16>
    tpu.vector_store %arg5[%c0_6, %c0_7, %c0_8], %14 {strides = array<i32>} : memref<1x128x256xbf16, #tpu.memory_space<vmem>>, vector<1x128x256xbf16>,
    %15 = arith.truncf %9 : vector<256x128xf32> to vector<256x128xbf16>
    %c0_9 = arith.constant 0 : index
    %c0_10 = arith.constant 0 : index
    %c0_11 = arith.constant 0 : index
    %16 = vector.load %arg6[%c0_9, %c0_10, %c0_11] : memref<1x256x128xbf16, #tpu.memory_space<vmem>>, vector<1x256x128xbf16>
    %17 = vector.shape_cast %16 : vector<1x256x128xbf16> to vector<256x128xbf16>
    %18 = vector.shape_cast %15 : vector<256x128xbf16> to vector<1x256x128xbf16>
    tpu.vector_store %arg6[%c0_9, %c0_10, %c0_11], %18 {strides = array<i32>} : memref<1x256x128xbf16, #tpu.memory_space<vmem>>, vector<1x256x128xbf16>,
    return
  }
  func.func @transform_0(%arg0: i32, %arg1: i32) -> (i32, i32, i32) {
    %c0_i32 = arith.constant 0 : i32
    %c0_i32_0 = arith.constant 0 : i32
    return %arg0, %arg1, %c0_i32 : i32, i32, i32
  }
  func.func @transform_1(%arg0: i32, %arg1: i32) -> (i32, i32) {
    %c0_i32 = arith.constant 0 : i32
    %c0_i32_0 = arith.constant 0 : i32
    %c0_i32_1 = arith.constant 0 : i32
    return %c0_i32, %c0_i32_0 : i32, i32
  }
  func.func @transform_2(%arg0: i32, %arg1: i32) -> (i32, i32) {
    %c0_i32 = arith.constant 0 : i32
    %c0_i32_0 = arith.constant 0 : i32
    %c0_i32_1 = arith.constant 0 : i32
    return %c0_i32, %c0_i32_0 : i32, i32
  }
  func.func @transform_3(%arg0: i32, %arg1: i32) -> (i32, i32, i32) {
    %c0_i32 = arith.constant 0 : i32
    %c0_i32_0 = arith.constant 0 : i32
    return %arg0, %c0_i32, %arg1 : i32, i32, i32
  }
  func.func @transform_4(%arg0: i32, %arg1: i32) -> (i32, i32, i32) {
    %c0_i32 = arith.constant 0 : i32
    %c0_i32_0 = arith.constant 0 : i32
    return %arg0, %arg1, %c0_i32 : i32, i32, i32
  }
}

</mosaic_0001>

<llo_original>
// kernel: tpu_custom_call.1
$region0: #{tpu_custom_call.1}
  #allocation0 [shape = 'u32[]', space=smem, size = 0x4, offset = 0x4, fixed_abs, tag = 'smem constant byte address 0x4 - core index']
  #allocation1 [shape = 'u32[144,128]{1,0:T(1,128)}', space=vmem, size = 0x12000, scoped, tag = 'internal scratch']
  %s0 = inlined_call_operand.hbm [shape: f32[2,512,128], index: 0, kind: input, shape index: {}]
  %s1 = inlined_call_operand.hbm [shape: bf16[128,256], index: 1, kind: input, shape index: {}]
  %s2 = inlined_call_operand.vmem [shape: f32[1,256], index: 2, kind: input, shape index: {}]
  %s3 = inlined_call_operand.hbm [shape: bf16[2,128,512], index: 3, kind: output, shape index: {0}]
  %s4 = inlined_call_operand.hbm [shape: bf16[2,512,128], index: 4, kind: output, shape index: {1}]
  %5 = xla_tuple %s3, %s4
  %s6 = sld [smem:[#allocation0]]
  $region61: #{tpu_custom_call.1} parent=0
    _
  %s8 = ssub.s32 1, %s6
  %s9 = scalar_select 0, %s8, %s6
  $region1: #{tpu_custom_call.1} parent=0
    #allocation2 [shape = 'u8[262144]{0}', space=vmem, size = 0x40000, scoped, tag = 'input window, operand 0']
    #allocation3 [shape = 's32[2]{0}', space=sflag, size = 0x8, scoped, tag = 'scoped memory for tpu_custom_call.1']
    #allocation4 [shape = 's32[2]{0}', space=sflag, size = 0x8, scoped, tag = 'scoped memory for tpu_custom_call.1']
    #allocation5 [shape = 'u8[65536]{0}', space=vmem, size = 0x10000, scoped, tag = 'input window, operand 1, single buffered']
    #allocation6 [shape = 's32[1]{0}', space=sflag, size = 0x4, scoped, tag = 'scoped memory for tpu_custom_call.1']
    #allocation7 [shape = 'u8[131072]{0}', space=vmem, size = 0x20000, scoped, tag = 'output window, operand 0']
    #allocation8 [shape = 'u8[131072]{0}', space=vmem, size = 0x20000, scoped, tag = 'output window, operand 1']
    #allocation9 [shape = 's32[2]{0}', space=sflag, size = 0x8, scoped, tag = 'scoped memory for tpu_custom_call.1']
    %10 = vsyncpa [#allocation3], 0
    %s11 = scalar_lea.sflag [#allocation3], 1
    %12 = vsyncpa %s11, 0
    %13 = vsyncpa [#allocation6], 0
    %14 = vsyncpa [#allocation4], 0
    %s15 = scalar_lea.sflag [#allocation4], 1
    %16 = vsyncpa %s15, 0
    %17 = vsyncpa [#allocation9], 0
    %s18 = scalar_lea.sflag [#allocation9], 1
    %19 = vsyncpa %s18, 0
    loop: start=0, step=1, limit=6
    $region2: #{tpu_custom_call.1} parent=1 // loop_pre_header
      _
    $region3: #{tpu_custom_call.1} parent=1 // loop_header
      %s21 = sphi 0, %s25
      %p22 = scmp.ge.s32.totalorder %s21, 6
      %s28 = sphi 0, %s40
      %s29 = sphi 0, %s36
      %s30 = sphi 0, %s28
      %s31 = sphi 0, %s29
      %s32 = sphi 0, %s30
      %s33 = sphi 0, %s31
      %s45 = sphi 0, %s47
      %s48 = sphi 0, %s45
      %s49 = sphi 0, %s48
      %s65 = sphi 0, %s49
      %s69 = sphi 0, %s69
      %s71 = sphi 0, %s69
      %s72 = sphi 0, %s71
      %s86 = sphi 0, %s72
      %s90 = sphi 0, %s90
      %s92 = sphi 0, %s90
      %s93 = sphi 0, %s92
      %s107 = sphi 0, %s93
      %s115 = sphi 0, %s117
      %s118 = sphi 0, %s115
      %s119 = sphi 0, %s118
      %s135 = sphi 0, %s119
      %s143 = sphi 0, %s145
      %s146 = sphi 0, %s143
      %s147 = sphi 0, %s146
      %s163 = sphi 0, %s147
    $region4: #{tpu_custom_call.1} parent=1 // loop_header_branch
      %24 = sbr.rel (%p22) target = $region8
    $region5: #{tpu_custom_call.1} parent=1 // loop_body
      %s26 = ssub.s32 %s21, 1
      %s27 = ssub.s32 %s21, 2
      %s34 = sadd.s32 1, %s29
      %p35 = scmp.ge.s32.totalorder %s34, 2
      %s36 = scalar_select %p35, 0, %s34
      %s37 = sadd.s32 1, %s28
      %s38 = scalar_select %p35, %s37, %s28
      %p39 = scmp.ge.s32.totalorder %s38, 2
      %s40 = scalar_select %p39, 0, %s38
      %s41 = ssub.s32 %s28, %s40
      %s42 = ssub.s32 %s29, %s36
      %s43 = sor.u32 %s41, %s42
      %p44 = scmp.eq.s32.totalorder %s43, 0
      %s46 = sadd.s32 %s45, 1
      %s47 = scalar_select %p44, %s45, %s46
      %p50 = pneg %p44
      %p51 = scmp.eq.s32.totalorder %s21, 3
      %p52 = por %p50, %p51
      %p53 = scmp.ne.s32.totalorder %s45, %s48
      %p54 = scmp.eq.s32.totalorder %s21, 0
      %p55 = por %p53, %p54
      %p56 = scmp.ne.s32.totalorder %s45, %s48
      %p57 = scmp.eq.s32.totalorder %s26, 3
      %p58 = por %p56, %p57
      %p59 = scmp.ne.s32.totalorder %s48, %s49
      %p60 = scmp.eq.s32.totalorder %s26, 0
      %p61 = por %p59, %p60
      %p62 = scmp.ne.s32.totalorder %s48, %s49
      %p63 = scmp.eq.s32.totalorder %s27, 3
      %p64 = por %p62, %p63
      %p66 = scmp.ne.s32.totalorder %s49, %s65
      %p67 = scmp.eq.s32.totalorder %s27, 0
      %p68 = por %p66, %p67
      %s70 = sadd.s32 %s69, 1
      %p73 = scmp.eq.s32.totalorder %s21, 3
      %p74 = scmp.ne.s32.totalorder %s69, %s71
      %p75 = scmp.eq.s32.totalorder %s21, 0
      %p76 = por %p74, %p75
      %p77 = scmp.ne.s32.totalorder %s69, %s71
      %p78 = scmp.eq.s32.totalorder %s26, 3
      %p79 = por %p77, %p78
      %p80 = scmp.ne.s32.totalorder %s71, %s72
      %p81 = scmp.eq.s32.totalorder %s26, 0
      %p82 = por %p80, %p81
      %p83 = scmp.ne.s32.totalorder %s71, %s72
      %p84 = scmp.eq.s32.totalorder %s27, 3
      %p85 = por %p83, %p84
      %p87 = scmp.ne.s32.totalorder %s72, %s86
      %p88 = scmp.eq.s32.totalorder %s27, 0
      %p89 = por %p87, %p88
      %s91 = sadd.s32 %s90, 1
      %p94 = scmp.eq.s32.totalorder %s21, 3
      %p95 = scmp.ne.s32.totalorder %s90, %s92
      %p96 = scmp.eq.s32.totalorder %s21, 0
      %p97 = por %p95, %p96
      %p98 = scmp.ne.s32.totalorder %s90, %s92
      %p99 = scmp.eq.s32.totalorder %s26, 3
      %p100 = por %p98, %p99
      %p101 = scmp.ne.s32.totalorder %s92, %s93
      %p102 = scmp.eq.s32.totalorder %s26, 0
      %p103 = por %p101, %p102
      %p104 = scmp.ne.s32.totalorder %s92, %s93
      %p105 = scmp.eq.s32.totalorder %s27, 3
      %p106 = por %p104, %p105
      %p108 = scmp.ne.s32.totalorder %s93, %s107
      %p109 = scmp.eq.s32.totalorder %s27, 0
      %p110 = por %p108, %p109
      %s111 = ssub.s32 %s28, %s40
      %s112 = ssub.s32 %s29, %s36
      %s113 = sor.u32 %s111, %s112
      %p114 = scmp.eq.s32.totalorder %s113, 0
      %s116 = sadd.s32 %s115, 1
      %s117 = scalar_select %p114, %s115, %s116
      %p120 = pneg %p114
      %p121 = scmp.eq.s32.totalorder %s21, 3
      %p122 = por %p120, %p121
      %p123 = scmp.ne.s32.totalorder %s115, %s118
      %p124 = scmp.eq.s32.totalorder %s21, 0
      %p125 = por %p123, %p124
      %p126 = scmp.ne.s32.totalorder %s115, %s118
      %p127 = scmp.eq.s32.totalorder %s26, 3
      %p128 = por %p126, %p127
      %p129 = scmp.ne.s32.totalorder %s118, %s119
      %p130 = scmp.eq.s32.totalorder %s26, 0
      %p131 = por %p129, %p130
      %p132 = scmp.ne.s32.totalorder %s118, %s119
      %p133 = scmp.eq.s32.totalorder %s27, 3
      %p134 = por %p132, %p133
      %p136 = scmp.ne.s32.totalorder %s119, %s135
      %p137 = scmp.eq.s32.totalorder %s27, 0
      %p138 = por %p136, %p137
      %s139 = ssub.s32 %s28, %s40
      %s140 = ssub.s32 %s29, %s36
      %s141 = sor.u32 %s139, %s140
      %p142 = scmp.eq.s32.totalorder %s141, 0
      %s144 = sadd.s32 %s143, 1
      %s145 = scalar_select %p142, %s143, %s144
      %p148 = pneg %p142
      %p149 = scmp.eq.s32.totalorder %s21, 3
      %p150 = por %p148, %p149
      %p151 = scmp.ne.s32.totalorder %s143, %s146
      %p152 = scmp.eq.s32.totalorder %s21, 0
      %p153 = por %p151, %p152
      %p154 = scmp.ne.s32.totalorder %s143, %s146
      %p155 = scmp.eq.s32.totalorder %s26, 3
      %p156 = por %p154, %p155
      %p157 = scmp.ne.s32.totalorder %s146, %s147
      %p158 = scmp.eq.s32.totalorder %s26, 0
      %p159 = por %p157, %p158
      %p160 = scmp.ne.s32.totalorder %s146, %s147
      %p161 = scmp.eq.s32.totalorder %s27, 3
      %p162 = por %p160, %p161
      %p164 = scmp.ne.s32.totalorder %s147, %s163
      %p165 = scmp.eq.s32.totalorder %s27, 0
      %p166 = por %p164, %p165
      %p167 = scmp.le.s32.totalorder 1, %s21
      %p168 = scmp.lt.s32.totalorder %s21, 5
      %p169 = pnand %p167, %p168
      %p170 = pneg %p169
      // Predicated region
      $region9: #{tpu_custom_call.1} parent=5 // pred_check
        _
      $region10: #{tpu_custom_call.1} parent=5 // pred_check_branch
        %172 = sbr.rel (%p169) target = $region12
      $region11: #{tpu_custom_call.1} parent=5 // pred_region
        %s173 = ssub.s32 %s21, 1
        // Predicated region
        $region13: #{tpu_custom_call.1} parent=11 // pred_check
          %p174 = pneg %p82
        $region14: #{tpu_custom_call.1} parent=11 // pred_check_branch
          %176 = sbr.rel (%p174) target = $region16
        $region15: #{tpu_custom_call.1} parent=11 // pred_region
          %s178 = ssub.s32 2048, 2048
          %179 = vsyncadd [#allocation6], %s178
          %s180 = sshll.u32 [#allocation5], 4
          %s181 = int_to_ptr.vmem [resolvable:$true] %s180
          %186 = dma.hbm_to_vmem [thread:$0]  %s1, 2048, %s181, [#allocation6], 128, 128, 8
        $region16: #{tpu_custom_call.1} parent=11 // pred_fallthru
          _
        // Predicated region
        $region17: #{tpu_custom_call.1} parent=11 // pred_check
          %p187 = pneg %p103
        $region18: #{tpu_custom_call.1} parent=11 // pred_check_branch
          %189 = sbr.rel (%p187) target = $region20
        $region19: #{tpu_custom_call.1} parent=11 // pred_region
          _
        $region20: #{tpu_custom_call.1} parent=11 // pred_fallthru
          _
      $region12: #{tpu_custom_call.1} parent=5 // pred_fallthru
        _
      %p190 = scmp.lt.s32.totalorder %s21, 4
      // Predicated region
      $region21: #{tpu_custom_call.1} parent=5 // pred_check
        %p191 = pneg %p190
      $region22: #{tpu_custom_call.1} parent=5 // pred_check_branch
        %193 = sbr.rel (%p191) target = $region24
      $region23: #{tpu_custom_call.1} parent=5 // pred_region
        // Predicated region
        $region25: #{tpu_custom_call.1} parent=23 // pred_check
          %p194 = pneg %p55
        $region26: #{tpu_custom_call.1} parent=23 // pred_check_branch
          %196 = sbr.rel (%p194) target = $region28
        $region27: #{tpu_custom_call.1} parent=23 // pred_region
          %s197 = sand.u32 %s45, 1
          %s198 = scalar_lea.sflag [#allocation3], %s197
          %s199 = sand.u32 %s45, 1
          %s200 = smul.addr %s199, 256
          %s201 = scalar_lea.vmem [#allocation2], %s200
          %s202 = smul.u32 32, %s29
          %s204 = ssub.s32 4096, 4096
          %205 = vsyncadd %s198, %s204
          %s206 = smul.addr %s28, 64
          %s207 = sadd.s32 %s202, %s206
          %s208 = smul.addr %s207, 128
          %s209 = scalar_lea.hbm %s0, %s208
          %s210 = sshll.u32 %s201, 4
          %s211 = int_to_ptr.vmem [resolvable:$true] %s210
          %216 = dma.hbm_to_vmem [thread:$0]  %s209, 4096, %s211, %s198, 128, 128, 8
        $region28: #{tpu_custom_call.1} parent=23 // pred_fallthru
          _
      $region24: #{tpu_custom_call.1} parent=5 // pred_fallthru
        _
      %p217 = scmp.le.s32.totalorder 1, %s21
      %p218 = scmp.lt.s32.totalorder %s21, 5
      %p219 = pnand %p217, %p218
      %p220 = pneg %p219
      // Predicated region
      $region29: #{tpu_custom_call.1} parent=5 // pred_check
        _
      $region30: #{tpu_custom_call.1} parent=5 // pred_check_branch
        %222 = sbr.rel (%p219) target = $region32
      $region31: #{tpu_custom_call.1} parent=5 // pred_region
        %s223 = ssub.s32 %s21, 1
        %s224 = sand.u32 %s48, 1
        %s225 = scalar_lea.sflag [#allocation3], %s224
        %s226 = sand.u32 %s48, 1
        %s227 = smul.addr %s226, 256
        %s228 = scalar_lea.vmem [#allocation2], %s227
        // Predicated region
        $region33: #{tpu_custom_call.1} parent=31 // pred_check
          %p229 = pneg %p61
        $region34: #{tpu_custom_call.1} parent=31 // pred_check_branch
          %231 = sbr.rel (%p229) target = $region36
        $region35: #{tpu_custom_call.1} parent=31 // pred_region
          %232 = dma.done %s225, 4096
        $region36: #{tpu_custom_call.1} parent=31 // pred_fallthru
          _
        // Predicated region
        $region37: #{tpu_custom_call.1} parent=31 // pred_check
          %p233 = pneg %p82
        $region38: #{tpu_custom_call.1} parent=31 // pred_check_branch
          %235 = sbr.rel (%p233) target = $region40
        $region39: #{tpu_custom_call.1} parent=31 // pred_region
          %236 = dma.done [#allocation6], 2048
        $region40: #{tpu_custom_call.1} parent=31 // pred_fallthru
          _
        %s237 = sand.u32 %s48, 1
        %s238 = scalar_lea.sflag [#allocation3], %s237
        %s239 = sand.u32 %s48, 1
        %s240 = smul.addr %s239, 256
        %s241 = scalar_lea.vmem [#allocation2], %s240
        %p242 = pneg %p61
        %p243 = pneg %p58
        %p244 = pneg %p82
        %p245 = pneg %p79
        %p246 = pneg %p103
        %p247 = pneg %p100
        %p248 = pneg %p131
        %p249 = pneg %p128
        %s250 = sand.u32 %s118, 1
        %s251 = scalar_lea.sflag [#allocation4], %s250
        %s252 = sand.u32 %s118, 1
        %s253 = smul.addr %s252, 128
        %s254 = scalar_lea.vmem [#allocation7], %s253
        %p255 = pneg %p159
        %p256 = pneg %p156
        %s257 = sand.u32 %s146, 1
        %s258 = scalar_lea.sflag [#allocation9], %s257
        %s259 = sand.u32 %s146, 1
        %s260 = smul.addr %s259, 128
        %s261 = scalar_lea.vmem [#allocation8], %s260
        %s262 = smul.u32 32, %s31
        %s263 = smul.u32 2, %s31
        %s264 = smul.u32 32, %s31
        %v266 = vld [vmem:[%s228] sm:$0xff]
        %v267 = vld [vmem:[%s228 + $0x8] sm:$0xff]
        %v268 = vld [vmem:[%s228 + $0x10] sm:$0xff]
        %v269 = vld [vmem:[%s228 + $0x18] sm:$0xff]
        %v270 = vld [vmem:[%s228 + $0x20] sm:$0xff]
        %v271 = vld [vmem:[%s228 + $0x28] sm:$0xff]
        %v272 = vld [vmem:[%s228 + $0x30] sm:$0xff]
        %v273 = vld [vmem:[%s228 + $0x38] sm:$0xff]
        %v274 = vld [vmem:[%s228 + $0x40] sm:$0xff]
        %v275 = vld [vmem:[%s228 + $0x48] sm:$0xff]
        %v276 = vld [vmem:[%s228 + $0x50] sm:$0xff]
        %v277 = vld [vmem:[%s228 + $0x58] sm:$0xff]
        %v278 = vld [vmem:[%s228 + $0x60] sm:$0xff]
        %v279 = vld [vmem:[%s228 + $0x68] sm:$0xff]
        %v280 = vld [vmem:[%s228 + $0x70] sm:$0xff]
        %v281 = vld [vmem:[%s228 + $0x78] sm:$0xff]
        %v282 = vld [vmem:[%s228 + $0x80] sm:$0xff]
        %v283 = vld [vmem:[%s228 + $0x88] sm:$0xff]
        %v284 = vld [vmem:[%s228 + $0x90] sm:$0xff]
        %v285 = vld [vmem:[%s228 + $0x98] sm:$0xff]
        %v286 = vld [vmem:[%s228 + $0xa0] sm:$0xff]
        %v287 = vld [vmem:[%s228 + $0xa8] sm:$0xff]
        %v288 = vld [vmem:[%s228 + $0xb0] sm:$0xff]
        %v289 = vld [vmem:[%s228 + $0xb8] sm:$0xff]
        %v290 = vld [vmem:[%s228 + $0xc0] sm:$0xff]
        %v291 = vld [vmem:[%s228 + $0xc8] sm:$0xff]
        %v292 = vld [vmem:[%s228 + $0xd0] sm:$0xff]
        %v293 = vld [vmem:[%s228 + $0xd8] sm:$0xff]
        %v294 = vld [vmem:[%s228 + $0xe0] sm:$0xff]
        %v295 = vld [vmem:[%s228 + $0xe8] sm:$0xff]
        %v296 = vld [vmem:[%s228 + $0xf0] sm:$0xff]
        %v297 = vld [vmem:[%s228 + $0xf8] sm:$0xff]
        %v298 = vpack.c.bf16 %v267, %v266
        %v299 = vpack.c.bf16 %v269, %v268
        %v300 = vpack.c.bf16 %v271, %v270
        %v301 = vpack.c.bf16 %v273, %v272
        %v302 = vpack.c.bf16 %v275, %v274
        %v303 = vpack.c.bf16 %v277, %v276
        %v304 = vpack.c.bf16 %v279, %v278
        %v305 = vpack.c.bf16 %v281, %v280
        %v306 = vpack.c.bf16 %v283, %v282
        %v307 = vpack.c.bf16 %v285, %v284
        %v308 = vpack.c.bf16 %v287, %v286
        %v309 = vpack.c.bf16 %v289, %v288
        %v310 = vpack.c.bf16 %v291, %v290
        %v311 = vpack.c.bf16 %v293, %v292
        %v312 = vpack.c.bf16 %v295, %v294
        %v313 = vpack.c.bf16 %v297, %v296
        %v314 = vld [vmem:[#allocation5] sm:$0xff]
        %v315 = vld [vmem:[#allocation5 + $0x8] sm:$0xff]
        %v316 = vld [vmem:[#allocation5 + $0x10] sm:$0xff]
        %v317 = vld [vmem:[#allocation5 + $0x18] sm:$0xff]
        %v318 = vld [vmem:[#allocation5 + $0x20] sm:$0xff]
        %v319 = vld [vmem:[#allocation5 + $0x28] sm:$0xff]
        %v320 = vld [vmem:[#allocation5 + $0x30] sm:$0xff]
        %v321 = vld [vmem:[#allocation5 + $0x38] sm:$0xff]
        %v322 = vld [vmem:[#allocation5 + $0x40] sm:$0xff]
        %v323 = vld [vmem:[#allocation5 + $0x48] sm:$0xff]
        %v324 = vld [vmem:[#allocation5 + $0x50] sm:$0xff]
        %v325 = vld [vmem:[#allocation5 + $0x58] sm:$0xff]
        %v326 = vld [vmem:[#allocation5 + $0x60] sm:$0xff]
        %v327 = vld [vmem:[#allocation5 + $0x68] sm:$0xff]
        %v328 = vld [vmem:[#allocation5 + $0x70] sm:$0xff]
        %v329 = vld [vmem:[#allocation5 + $0x78] sm:$0xff]
        %v330 = vld [vmem:[%s2] sm:$0x3]
        %v332 = vlaneseq
        %v333 = vshrl.u32 %v332, 7
        %v334 = vsub.s32 0, %v333
        %v335 = vrot.slane %v330, %v334
        %v336 = vlaneseq
        %v337 = vshrl.u32 %v336, 7
        %v338 = vsub.s32 1, %v337
        %v339 = vrot.slane %v330, %v338
        %v358 = vunpack.c.l.b16 %v314
        %v359 = vunpack.c.h.b16 %v314
        %v360 = vunpack.c.l.b16 %v315
        %v361 = vunpack.c.h.b16 %v315
        %v362 = vunpack.c.l.b16 %v316
        %v363 = vunpack.c.h.b16 %v316
        %v364 = vunpack.c.l.b16 %v317
        %v365 = vunpack.c.h.b16 %v317
        %v366 = vunpack.c.l.b16 %v318
        %v367 = vunpack.c.h.b16 %v318
        %v368 = vunpack.c.l.b16 %v319
        %v369 = vunpack.c.h.b16 %v319
        %v370 = vunpack.c.l.b16 %v320
        %v371 = vunpack.c.h.b16 %v320
        %v372 = vunpack.c.l.b16 %v321
        %v373 = vunpack.c.h.b16 %v321
        %v374 = vunpack.c.l.b16 %v322
        %v375 = vunpack.c.h.b16 %v322
        %v376 = vunpack.c.l.b16 %v323
        %v377 = vunpack.c.h.b16 %v323
        %v378 = vunpack.c.l.b16 %v324
        %v379 = vunpack.c.h.b16 %v324
        %v380 = vunpack.c.l.b16 %v325
        %v381 = vunpack.c.h.b16 %v325
        %v382 = vunpack.c.l.b16 %v326
        %v383 = vunpack.c.h.b16 %v326
        %v384 = vunpack.c.l.b16 %v327
        %v385 = vunpack.c.h.b16 %v327
        %v386 = vunpack.c.l.b16 %v328
        %v387 = vunpack.c.h.b16 %v328
        %v388 = vunpack.c.l.b16 %v329
        %v389 = vunpack.c.h.b16 %v329
        %v390 = vpack.c.b16 %v360, %v358
        %v391 = vpack.c.b16 %v361, %v359
        %v392 = vpack.c.b16 %v364, %v362
        %v393 = vpack.c.b16 %v365, %v363
        %v394 = vpack.c.b16 %v368, %v366
        %v395 = vpack.c.b16 %v369, %v367
        %v396 = vpack.c.b16 %v372, %v370
        %v397 = vpack.c.b16 %v373, %v371
        %v398 = vpack.c.b16 %v376, %v374
        %v399 = vpack.c.b16 %v377, %v375
        %v400 = vpack.c.b16 %v380, %v378
        %v401 = vpack.c.b16 %v381, %v379
        %v402 = vpack.c.b16 %v384, %v382
        %v403 = vpack.c.b16 %v385, %v383
        %v404 = vpack.c.b16 %v388, %v386
        %v405 = vpack.c.b16 %v389, %v387
        %422 = vmatprep.subr.bf16.mxu0 %v391
        %423 = vmatpush1.bf16.msra.mxu0 %v390
        %424 = vmatprep.subr.bf16.mxu0 %v393
        %425 = vmatpush1.bf16.msra.mxu0 %v392
        %426 = vmatprep.subr.bf16.mxu0 %v395
        %427 = vmatpush1.bf16.msra.mxu0 %v394
        %428 = vmatprep.subr.bf16.mxu0 %v397
        %429 = vmatpush1.bf16.msra.mxu0 %v396
        %430 = vmatprep.subr.bf16.mxu0 %v399
        %431 = vmatpush1.bf16.msra.mxu0 %v398
        %432 = vmatprep.subr.bf16.mxu0 %v401
        %433 = vmatpush1.bf16.msra.mxu0 %v400
        %434 = vmatprep.subr.bf16.mxu0 %v403
        %435 = vmatpush1.bf16.msra.mxu0 %v402
        %436 = vmatprep.subr.bf16.mxu0 %v405
        %437 = vmatpush1.bf16.msra.mxu0 %v404
        %438 = vmatprep.subr.bf16.mxu0 0
        %439 = vmatpush1.bf16.msra.mxu0 0
        %440 = vmatprep.subr.bf16.mxu0 0
        %441 = vmatpush1.bf16.msra.mxu0 0
        %442 = vmatprep.subr.bf16.mxu0 0
        %443 = vmatpush1.bf16.msra.mxu0 0
        %444 = vmatprep.subr.bf16.mxu0 0
        %445 = vmatpush1.bf16.msra.mxu0 0
        %446 = vmatprep.subr.bf16.mxu0 0
        %447 = vmatpush1.bf16.msra.mxu0 0
        %448 = vmatprep.subr.bf16.mxu0 0
        %449 = vmatpush1.bf16.msra.mxu0 0
        %450 = vmatprep.subr.bf16.mxu0 0
        %451 = vmatpush1.bf16.msra.mxu0 0
        %452 = vmatprep.subr.bf16.mxu0 0
        %453 = vmatpush1.bf16.msra.mxu0 0
        %454 = vmatprep.mubr.bf16.mxu0 0
        %455 = vmatmul.mubr.bf16.gmra.mrb[0].mxu0 %v298
        %v456 = vpop.f32.mrb[0].mxu0
        %v457 = vadd.f32 %v335, %v456
        %v458 = vpop.f32.mrb[0].mxu0
        %v459 = vadd.f32 %v339, %v458
        %v460 = vpop.f32.mrb[0].mxu0
        %v461 = vadd.f32 %v335, %v460
        %v462 = vpop.f32.mrb[0].mxu0
        %v463 = vadd.f32 %v339, %v462
        %464 = vmatprep.mubr.bf16.mxu0 0
        %465 = vmatmul.mubr.bf16.gmra.mrb[0].mxu0 %v299
        %v466 = vpop.f32.mrb[0].mxu0
        %v467 = vadd.f32 %v335, %v466
        %v468 = vpop.f32.mrb[0].mxu0
        %v469 = vadd.f32 %v339, %v468
        %v470 = vpop.f32.mrb[0].mxu0
        %v471 = vadd.f32 %v335, %v470
        %v472 = vpop.f32.mrb[0].mxu0
        %v473 = vadd.f32 %v339, %v472
        %474 = vmatprep.mubr.bf16.mxu0 0
        %475 = vmatmul.mubr.bf16.gmra.mrb[0].mxu0 %v300
        %v476 = vpop.f32.mrb[0].mxu0
        %v477 = vadd.f32 %v335, %v476
        %v478 = vpop.f32.mrb[0].mxu0
        %v479 = vadd.f32 %v339, %v478
        %v480 = vpop.f32.mrb[0].mxu0
        %v481 = vadd.f32 %v335, %v480
        %v482 = vpop.f32.mrb[0].mxu0
        %v483 = vadd.f32 %v339, %v482
        %484 = vmatprep.mubr.bf16.mxu0 0
        %485 = vmatmul.mubr.bf16.gmra.mrb[0].mxu0 %v301
        %v486 = vpop.f32.mrb[0].mxu0
        %v487 = vadd.f32 %v335, %v486
        %v488 = vpop.f32.mrb[0].mxu0
        %v489 = vadd.f32 %v339, %v488
        %v490 = vpop.f32.mrb[0].mxu0
        %v491 = vadd.f32 %v335, %v490
        %v492 = vpop.f32.mrb[0].mxu0
        %v493 = vadd.f32 %v339, %v492
        %494 = vmatprep.mubr.bf16.mxu0 0
        %495 = vmatmul.mubr.bf16.gmra.mrb[0].mxu0 %v302
        %v496 = vpop.f32.mrb[0].mxu0
        %v497 = vadd.f32 %v335, %v496
        %v498 = vpop.f32.mrb[0].mxu0
        %v499 = vadd.f32 %v339, %v498
        %v500 = vpop.f32.mrb[0].mxu0
        %v501 = vadd.f32 %v335, %v500
        %v502 = vpop.f32.mrb[0].mxu0
        %v503 = vadd.f32 %v339, %v502
        %504 = vmatprep.mubr.bf16.mxu0 0
        %505 = vmatmul.mubr.bf16.gmra.mrb[0].mxu0 %v303
        %v506 = vpop.f32.mrb[0].mxu0
        %v507 = vadd.f32 %v335, %v506
        %v508 = vpop.f32.mrb[0].mxu0
        %v509 = vadd.f32 %v339, %v508
        %v510 = vpop.f32.mrb[0].mxu0
        %v511 = vadd.f32 %v335, %v510
        %v512 = vpop.f32.mrb[0].mxu0
        %v513 = vadd.f32 %v339, %v512
        %514 = vmatprep.mubr.bf16.mxu0 0
        %515 = vmatmul.mubr.bf16.gmra.mrb[0].mxu0 %v304
        %v516 = vpop.f32.mrb[0].mxu0
        %v517 = vadd.f32 %v335, %v516
        %v518 = vpop.f32.mrb[0].mxu0
        %v519 = vadd.f32 %v339, %v518
        %v520 = vpop.f32.mrb[0].mxu0
        %v521 = vadd.f32 %v335, %v520
        %v522 = vpop.f32.mrb[0].mxu0
        %v523 = vadd.f32 %v339, %v522
        %524 = vmatprep.mubr.bf16.mxu0 0
        %525 = vmatmul.mubr.bf16.gmra.mrb[0].mxu0 %v305
        %v526 = vpop.f32.mrb[0].mxu0
        %v527 = vadd.f32 %v335, %v526
        %v528 = vpop.f32.mrb[0].mxu0
        %v529 = vadd.f32 %v339, %v528
        %v530 = vpop.f32.mrb[0].mxu0
        %v531 = vadd.f32 %v335, %v530
        %v532 = vpop.f32.mrb[0].mxu0
        %v533 = vadd.f32 %v339, %v532
        %534 = vmatprep.mubr.bf16.mxu0 0
        %535 = vmatmul.mubr.bf16.gmra.mrb[0].mxu0 %v306
        %v536 = vpop.f32.mrb[0].mxu0
        %v537 = vadd.f32 %v335, %v536
        %v538 = vpop.f32.mrb[0].mxu0
        %v539 = vadd.f32 %v339, %v538
        %v540 = vpop.f32.mrb[0].mxu0
        %v541 = vadd.f32 %v335, %v540
        %v542 = vpop.f32.mrb[0].mxu0
        %v543 = vadd.f32 %v339, %v542
        %544 = vmatprep.mubr.bf16.mxu0 0
        %545 = vmatmul.mubr.bf16.gmra.mrb[0].mxu0 %v307
        %v546 = vpop.f32.mrb[0].mxu0
        %v547 = vadd.f32 %v335, %v546
        %v548 = vpop.f32.mrb[0].mxu0
        %v549 = vadd.f32 %v339, %v548
        %v550 = vpop.f32.mrb[0].mxu0
        %v551 = vadd.f32 %v335, %v550
        %v552 = vpop.f32.mrb[0].mxu0
        %v553 = vadd.f32 %v339, %v552
        %554 = vmatprep.mubr.bf16.mxu0 0
        %555 = vmatmul.mubr.bf16.gmra.mrb[0].mxu0 %v308
        %v556 = vpop.f32.mrb[0].mxu0
        %v557 = vadd.f32 %v335, %v556
        %v558 = vpop.f32.mrb[0].mxu0
        %v559 = vadd.f32 %v339, %v558
        %v560 = vpop.f32.mrb[0].mxu0
        %v561 = vadd.f32 %v335, %v560
        %v562 = vpop.f32.mrb[0].mxu0
        %v563 = vadd.f32 %v339, %v562
        %564 = vmatprep.mubr.bf16.mxu0 0
        %565 = vmatmul.mubr.bf16.gmra.mrb[0].mxu0 %v309
        %v566 = vpop.f32.mrb[0].mxu0
        %v567 = vadd.f32 %v335, %v566
        %v568 = vpop.f32.mrb[0].mxu0
        %v569 = vadd.f32 %v339, %v568
        %v570 = vpop.f32.mrb[0].mxu0
        %v571 = vadd.f32 %v335, %v570
        %v572 = vpop.f32.mrb[0].mxu0
        %v573 = vadd.f32 %v339, %v572
        %574 = vmatprep.mubr.bf16.mxu0 0
        %575 = vmatmul.mubr.bf16.gmra.mrb[0].mxu0 %v310
        %v576 = vpop.f32.mrb[0].mxu0
        %v577 = vadd.f32 %v335, %v576
        %v578 = vpop.f32.mrb[0].mxu0
        %v579 = vadd.f32 %v339, %v578
        %v580 = vpop.f32.mrb[0].mxu0
        %v581 = vadd.f32 %v335, %v580
        %v582 = vpop.f32.mrb[0].mxu0
        %v583 = vadd.f32 %v339, %v582
        %584 = vmatprep.mubr.bf16.mxu0 0
        %585 = vmatmul.mubr.bf16.gmra.mrb[0].mxu0 %v311
        %v586 = vpop.f32.mrb[0].mxu0
        %v587 = vadd.f32 %v335, %v586
        %v588 = vpop.f32.mrb[0].mxu0
        %v589 = vadd.f32 %v339, %v588
        %v590 = vpop.f32.mrb[0].mxu0
        %v591 = vadd.f32 %v335, %v590
        %v592 = vpop.f32.mrb[0].mxu0
        %v593 = vadd.f32 %v339, %v592
        %594 = vmatprep.mubr.bf16.mxu0 0
        %595 = vmatmul.mubr.bf16.gmra.mrb[0].mxu0 %v312
        %v596 = vpop.f32.mrb[0].mxu0
        %v597 = vadd.f32 %v335, %v596
        %v598 = vpop.f32.mrb[0].mxu0
        %v599 = vadd.f32 %v339, %v598
        %v600 = vpop.f32.mrb[0].mxu0
        %v601 = vadd.f32 %v335, %v600
        %v602 = vpop.f32.mrb[0].mxu0
        %v603 = vadd.f32 %v339, %v602
        %604 = vmatprep.mubr.bf16.mxu0 0
        %605 = vmatmul.mubr.bf16.gmra.mrb[0].mxu0 %v313
        %v606 = vpop.f32.mrb[0].mxu0
        %v607 = vadd.f32 %v335, %v606
        %v608 = vpop.f32.mrb[0].mxu0
        %v609 = vadd.f32 %v339, %v608
        %v610 = vpop.f32.mrb[0].mxu0
        %v611 = vadd.f32 %v335, %v610
        %v612 = vpop.f32.mrb[0].mxu0
        %v613 = vadd.f32 %v339, %v612
        %614 = vdwg.mxu0
        %615 = vxpose.xlu0.b32.start [1/16] %v457, 128
        %616 = vxpose.xlu0.b32.cont [2/16] %v461, 128
        %617 = vxpose.xlu0.b32.cont [3/16] %v467, 128
        %618 = vxpose.xlu0.b32.cont [4/16] %v471, 128
        %619 = vxpose.xlu0.b32.cont [5/16] %v477, 128
        %620 = vxpose.xlu0.b32.cont [6/16] %v481, 128
        %621 = vxpose.xlu0.b32.cont [7/16] %v487, 128
        %622 = vxpose.xlu0.b32.cont [8/16] %v491, 128
        %623 = vxpose.xlu0.b32.cont [9/16] %v497, 128
        %624 = vxpose.xlu0.b32.cont [10/16] %v501, 128
        %625 = vxpose.xlu0.b32.cont [11/16] %v507, 128
        %626 = vxpose.xlu0.b32.cont [12/16] %v511, 128
        %627 = vxpose.xlu0.b32.cont [13/16] %v517, 128
        %628 = vxpose.xlu0.b32.cont [14/16] %v521, 128
        %629 = vxpose.xlu0.b32.cont [15/16] %v527, 128
        %630 = vxpose.xlu0.b32.end [16/16] %v531, 128
        %v631 = vpop.trf.xlu0
        %v632 = vpop.trf.xlu0
        %v633 = vpop.trf.xlu0
        %v634 = vpop.trf.xlu0
        %v635 = vpop.trf.xlu0
        %v636 = vpop.trf.xlu0
        %v637 = vpop.trf.xlu0
        %v638 = vpop.trf.xlu0
        %v639 = vpop.trf.xlu0
        %v640 = vpop.trf.xlu0
        %v641 = vpop.trf.xlu0
        %v642 = vpop.trf.xlu0
        %v643 = vpop.trf.xlu0
        %v644 = vpop.trf.xlu0
        %v645 = vpop.trf.xlu0
        %v646 = vpop.trf.xlu0
        %647 = vxpose.xlu0.b32.start [1/16] %v537, 128
        %648 = vxpose.xlu0.b32.cont [2/16] %v541, 128
        %649 = vxpose.xlu0.b32.cont [3/16] %v547, 128
        %650 = vxpose.xlu0.b32.cont [4/16] %v551, 128
        %651 = vxpose.xlu0.b32.cont [5/16] %v557, 128
        %652 = vxpose.xlu0.b32.cont [6/16] %v561, 128
        %653 = vxpose.xlu0.b32.cont [7/16] %v567, 128
        %654 = vxpose.xlu0.b32.cont [8/16] %v571, 128
        %655 = vxpose.xlu0.b32.cont [9/16] %v577, 128
        %656 = vxpose.xlu0.b32.cont [10/16] %v581, 128
        %657 = vxpose.xlu0.b32.cont [11/16] %v587, 128
        %658 = vxpose.xlu0.b32.cont [12/16] %v591, 128
        %659 = vxpose.xlu0.b32.cont [13/16] %v597, 128
        %660 = vxpose.xlu0.b32.cont [14/16] %v601, 128
        %661 = vxpose.xlu0.b32.cont [15/16] %v607, 128
        %662 = vxpose.xlu0.b32.end [16/16] %v611, 128
        %v663 = vpop.trf.xlu0
        %v664 = vpop.trf.xlu0
        %v665 = vpop.trf.xlu0
        %v666 = vpop.trf.xlu0
        %v667 = vpop.trf.xlu0
        %v668 = vpop.trf.xlu0
        %v669 = vpop.trf.xlu0
        %v670 = vpop.trf.xlu0
        %v671 = vpop.trf.xlu0
        %v672 = vpop.trf.xlu0
        %v673 = vpop.trf.xlu0
        %v674 = vpop.trf.xlu0
        %v675 = vpop.trf.xlu0
        %v676 = vpop.trf.xlu0
        %v677 = vpop.trf.xlu0
        %v678 = vpop.trf.xlu0
        %v679 = vpack.c.bf16 %v632, %v631
        %v680 = vpack.c.bf16 %v664, %v663
        %v681 = vpack.c.bf16 %v634, %v633
        %v682 = vpack.c.bf16 %v666, %v665
        %v683 = vpack.c.bf16 %v636, %v635
        %v684 = vpack.c.bf16 %v668, %v667
        %v685 = vpack.c.bf16 %v638, %v637
        %v686 = vpack.c.bf16 %v670, %v669
        %v687 = vpack.c.bf16 %v640, %v639
        %v688 = vpack.c.bf16 %v672, %v671
        %v689 = vpack.c.bf16 %v642, %v641
        %v690 = vpack.c.bf16 %v674, %v673
        %v691 = vpack.c.bf16 %v644, %v643
        %v692 = vpack.c.bf16 %v676, %v675
        %v693 = vpack.c.bf16 %v646, %v645
        %v694 = vpack.c.bf16 %v678, %v677
        %v711 = vunpack.c.l.b16 %v679
        %v712 = vunpack.c.l.b16 %v680
        %v713 = vunpack.c.h.b16 %v679
        %v714 = vunpack.c.h.b16 %v680
        %v715 = vunpack.c.l.b16 %v681
        %v716 = vunpack.c.l.b16 %v682
        %v717 = vunpack.c.h.b16 %v681
        %v718 = vunpack.c.h.b16 %v682
        %v719 = vunpack.c.l.b16 %v683
        %v720 = vunpack.c.l.b16 %v684
        %v721 = vunpack.c.h.b16 %v683
        %v722 = vunpack.c.h.b16 %v684
        %v723 = vunpack.c.l.b16 %v685
        %v724 = vunpack.c.l.b16 %v686
        %v725 = vunpack.c.h.b16 %v685
        %v726 = vunpack.c.h.b16 %v686
        %v727 = vunpack.c.l.b16 %v687
        %v728 = vunpack.c.l.b16 %v688
        %v729 = vunpack.c.h.b16 %v687
        %v730 = vunpack.c.h.b16 %v688
        %v731 = vunpack.c.l.b16 %v689
        %v732 = vunpack.c.l.b16 %v690
        %v733 = vunpack.c.h.b16 %v689
        %v734 = vunpack.c.h.b16 %v690
        %v735 = vunpack.c.l.b16 %v691
        %v736 = vunpack.c.l.b16 %v692
        %v737 = vunpack.c.h.b16 %v691
        %v738 = vunpack.c.h.b16 %v692
        %v739 = vunpack.c.l.b16 %v693
        %v740 = vunpack.c.l.b16 %v694
        %v741 = vunpack.c.h.b16 %v693
        %v742 = vunpack.c.h.b16 %v694
        %v743 = vpack.c.b16 %v712, %v711
        %v744 = vpack.c.b16 %v714, %v713
        %v745 = vpack.c.b16 %v716, %v715
        %v746 = vpack.c.b16 %v718, %v717
        %v747 = vpack.c.b16 %v720, %v719
        %v748 = vpack.c.b16 %v722, %v721
        %v749 = vpack.c.b16 %v724, %v723
        %v750 = vpack.c.b16 %v726, %v725
        %v751 = vpack.c.b16 %v728, %v727
        %v752 = vpack.c.b16 %v730, %v729
        %v753 = vpack.c.b16 %v732, %v731
        %v754 = vpack.c.b16 %v734, %v733
        %v755 = vpack.c.b16 %v736, %v735
        %v756 = vpack.c.b16 %v738, %v737
        %v757 = vpack.c.b16 %v740, %v739
        %v758 = vpack.c.b16 %v742, %v741
        %775 = vst [vmem:[%s254] sm:$0xff] %v743
        %776 = vst [vmem:[%s254 + $0x8] sm:$0xff] %v744
        %777 = vst [vmem:[%s254 + $0x10] sm:$0xff] %v745
        %778 = vst [vmem:[%s254 + $0x18] sm:$0xff] %v746
        %779 = vst [vmem:[%s254 + $0x20] sm:$0xff] %v747
        %780 = vst [vmem:[%s254 + $0x28] sm:$0xff] %v748
        %781 = vst [vmem:[%s254 + $0x30] sm:$0xff] %v749
        %782 = vst [vmem:[%s254 + $0x38] sm:$0xff] %v750
        %783 = vst [vmem:[%s254 + $0x40] sm:$0xff] %v751
        %784 = vst [vmem:[%s254 + $0x48] sm:$0xff] %v752
        %785 = vst [vmem:[%s254 + $0x50] sm:$0xff] %v753
        %786 = vst [vmem:[%s254 + $0x58] sm:$0xff] %v754
        %787 = vst [vmem:[%s254 + $0x60] sm:$0xff] %v755
        %788 = vst [vmem:[%s254 + $0x68] sm:$0xff] %v756
        %789 = vst [vmem:[%s254 + $0x70] sm:$0xff] %v757
        %790 = vst [vmem:[%s254 + $0x78] sm:$0xff] %v758
        %v791 = vpack.c.bf16 %v463, %v459
        %v792 = vpack.c.bf16 %v473, %v469
        %v793 = vpack.c.bf16 %v483, %v479
        %v794 = vpack.c.bf16 %v493, %v489
        %v795 = vpack.c.bf16 %v503, %v499
        %v796 = vpack.c.bf16 %v513, %v509
        %v797 = vpack.c.bf16 %v523, %v519
        %v798 = vpack.c.bf16 %v533, %v529
        %v799 = vpack.c.bf16 %v543, %v539
        %v800 = vpack.c.bf16 %v553, %v549
        %v801 = vpack.c.bf16 %v563, %v559
        %v802 = vpack.c.bf16 %v573, %v569
        %v803 = vpack.c.bf16 %v583, %v579
        %v804 = vpack.c.bf16 %v593, %v589
        %v805 = vpack.c.bf16 %v603, %v599
        %v806 = vpack.c.bf16 %v613, %v609
        %v823 = vunpack.c.l.b16 %v791
        %v824 = vunpack.c.h.b16 %v791
        %v825 = vunpack.c.l.b16 %v792
        %v826 = vunpack.c.h.b16 %v792
        %v827 = vunpack.c.l.b16 %v793
        %v828 = vunpack.c.h.b16 %v793
        %v829 = vunpack.c.l.b16 %v794
        %v830 = vunpack.c.h.b16 %v794
        %v831 = vunpack.c.l.b16 %v795
        %v832 = vunpack.c.h.b16 %v795
        %v833 = vunpack.c.l.b16 %v796
        %v834 = vunpack.c.h.b16 %v796
        %v835 = vunpack.c.l.b16 %v797
        %v836 = vunpack.c.h.b16 %v797
        %v837 = vunpack.c.l.b16 %v798
        %v838 = vunpack.c.h.b16 %v798
        %v839 = vunpack.c.l.b16 %v799
        %v840 = vunpack.c.h.b16 %v799
        %v841 = vunpack.c.l.b16 %v800
        %v842 = vunpack.c.h.b16 %v800
        %v843 = vunpack.c.l.b16 %v801
        %v844 = vunpack.c.h.b16 %v801
        %v845 = vunpack.c.l.b16 %v802
        %v846 = vunpack.c.h.b16 %v802
        %v847 = vunpack.c.l.b16 %v803
        %v848 = vunpack.c.h.b16 %v803
        %v849 = vunpack.c.l.b16 %v804
        %v850 = vunpack.c.h.b16 %v804
        %v851 = vunpack.c.l.b16 %v805
        %v852 = vunpack.c.h.b16 %v805
        %v853 = vunpack.c.l.b16 %v806
        %v854 = vunpack.c.h.b16 %v806
        %v855 = vpack.c.b16 %v823, %v823
        %v856 = vpack.c.b16 %v824, %v824
        %v857 = vpack.c.b16 %v825, %v825
        %v858 = vpack.c.b16 %v826, %v826
        %v859 = vpack.c.b16 %v827, %v827
        %v860 = vpack.c.b16 %v828, %v828
        %v861 = vpack.c.b16 %v829, %v829
        %v862 = vpack.c.b16 %v830, %v830
        %v863 = vpack.c.b16 %v831, %v831
        %v864 = vpack.c.b16 %v832, %v832
        %v865 = vpack.c.b16 %v833, %v833
        %v866 = vpack.c.b16 %v834, %v834
        %v867 = vpack.c.b16 %v835, %v835
        %v868 = vpack.c.b16 %v836, %v836
        %v869 = vpack.c.b16 %v837, %v837
        %v870 = vpack.c.b16 %v838, %v838
        %v871 = vpack.c.b16 %v839, %v839
        %v872 = vpack.c.b16 %v840, %v840
        %v873 = vpack.c.b16 %v841, %v841
        %v874 = vpack.c.b16 %v842, %v842
        %v875 = vpack.c.b16 %v843, %v843
        %v876 = vpack.c.b16 %v844, %v844
        %v877 = vpack.c.b16 %v845, %v845
        %v878 = vpack.c.b16 %v846, %v846
        %v879 = vpack.c.b16 %v847, %v847
        %v880 = vpack.c.b16 %v848, %v848
        %v881 = vpack.c.b16 %v849, %v849
        %v882 = vpack.c.b16 %v850, %v850
        %v883 = vpack.c.b16 %v851, %v851
        %v884 = vpack.c.b16 %v852, %v852
        %v885 = vpack.c.b16 %v853, %v853
        %v886 = vpack.c.b16 %v854, %v854
        %919 = vst [vmem:[%s261] sm:$0xf] %v855
        %920 = vst [vmem:[%s261 + $0x4] sm:$0xf] %v856
        %921 = vst [vmem:[%s261 + $0x8] sm:$0xf] %v857
        %922 = vst [vmem:[%s261 + $0xc] sm:$0xf] %v858
        %923 = vst [vmem:[%s261 + $0x10] sm:$0xf] %v859
        %924 = vst [vmem:[%s261 + $0x14] sm:$0xf] %v860
        %925 = vst [vmem:[%s261 + $0x18] sm:$0xf] %v861
        %926 = vst [vmem:[%s261 + $0x1c] sm:$0xf] %v862
        %927 = vst [vmem:[%s261 + $0x20] sm:$0xf] %v863
        %928 = vst [vmem:[%s261 + $0x24] sm:$0xf] %v864
        %929 = vst [vmem:[%s261 + $0x28] sm:$0xf] %v865
        %930 = vst [vmem:[%s261 + $0x2c] sm:$0xf] %v866
        %931 = vst [vmem:[%s261 + $0x30] sm:$0xf] %v867
        %932 = vst [vmem:[%s261 + $0x34] sm:$0xf] %v868
        %933 = vst [vmem:[%s261 + $0x38] sm:$0xf] %v869
        %934 = vst [vmem:[%s261 + $0x3c] sm:$0xf] %v870
        %935 = vst [vmem:[%s261 + $0x40] sm:$0xf] %v871
        %936 = vst [vmem:[%s261 + $0x44] sm:$0xf] %v872
        %937 = vst [vmem:[%s261 + $0x48] sm:$0xf] %v873
        %938 = vst [vmem:[%s261 + $0x4c] sm:$0xf] %v874
        %939 = vst [vmem:[%s261 + $0x50] sm:$0xf] %v875
        %940 = vst [vmem:[%s261 + $0x54] sm:$0xf] %v876
        %941 = vst [vmem:[%s261 + $0x58] sm:$0xf] %v877
        %942 = vst [vmem:[%s261 + $0x5c] sm:$0xf] %v878
        %943 = vst [vmem:[%s261 + $0x60] sm:$0xf] %v879
        %944 = vst [vmem:[%s261 + $0x64] sm:$0xf] %v880
        %945 = vst [vmem:[%s261 + $0x68] sm:$0xf] %v881
        %946 = vst [vmem:[%s261 + $0x6c] sm:$0xf] %v882
        %947 = vst [vmem:[%s261 + $0x70] sm:$0xf] %v883
        %948 = vst [vmem:[%s261 + $0x74] sm:$0xf] %v884
        %949 = vst [vmem:[%s261 + $0x78] sm:$0xf] %v885
        %950 = vst [vmem:[%s261 + $0x7c] sm:$0xf] %v886
        %s951 = sand.u32 %s118, 1
        %s952 = scalar_lea.sflag [#allocation4], %s951
        %s953 = sand.u32 %s118, 1
        %s954 = smul.addr %s953, 128
        %s955 = scalar_lea.vmem [#allocation7], %s954
        %s956 = sand.u32 %s146, 1
        %s957 = scalar_lea.sflag [#allocation9], %s956
        %s958 = sand.u32 %s146, 1
        %s959 = smul.addr %s958, 128
        %s960 = scalar_lea.vmem [#allocation8], %s959
        // Predicated region
        $region41: #{tpu_custom_call.1} parent=31 // pred_check
          %p961 = pneg %p128
        $region42: #{tpu_custom_call.1} parent=31 // pred_check_branch
          %963 = sbr.rel (%p961) target = $region44
        $region43: #{tpu_custom_call.1} parent=31 // pred_region
          %s964 = smul.u32 2, %s31
          %s966 = ssub.s32 2048, 2048
          %967 = vsyncadd %s952, %s966
          %s968 = smul.addr %s30, 64
          %s969 = sadd.s32 %s964, %s968
          %s970 = smul.addr %s969, 64
          %s971 = scalar_lea.hbm %s3, %s970
          %s972 = sshll.u32 %s955, 4
          %s973 = int_to_ptr.vmem [resolvable:$true] %s972
          %978 = dma.vmem_to_hbm [thread:$0]  %s973, 2048, %s971, %s952, 128, 256, 8
        $region44: #{tpu_custom_call.1} parent=31 // pred_fallthru
          _
        // Predicated region
        $region45: #{tpu_custom_call.1} parent=31 // pred_check
          %p979 = pneg %p156
        $region46: #{tpu_custom_call.1} parent=31 // pred_check_branch
          %981 = sbr.rel (%p979) target = $region48
        $region47: #{tpu_custom_call.1} parent=31 // pred_region
          %s982 = smul.u32 32, %s31
          %s984 = ssub.s32 2048, 2048
          %985 = vsyncadd %s957, %s984
          %s986 = smul.addr %s30, 64
          %s987 = sadd.s32 %s982, %s986
          %s988 = smul.addr %s987, 64
          %s989 = scalar_lea.hbm %s4, %s988
          %s990 = sshll.u32 %s960, 4
          %s991 = int_to_ptr.vmem [resolvable:$true] %s990
          %996 = dma.vmem_to_hbm [thread:$0]  %s991, 2048, %s989, %s957, 64, 64, 4
        $region48: #{tpu_custom_call.1} parent=31 // pred_fallthru
          _
      $region32: #{tpu_custom_call.1} parent=5 // pred_fallthru
        _
      %p997 = scmp.le.s32.totalorder 2, %s21
      // Predicated region
      $region49: #{tpu_custom_call.1} parent=5 // pred_check
        %p998 = pneg %p997
      $region50: #{tpu_custom_call.1} parent=5 // pred_check_branch
        %1000 = sbr.rel (%p998) target = $region52
      $region51: #{tpu_custom_call.1} parent=5 // pred_region
        %s1001 = ssub.s32 %s21, 2
        // Predicated region
        $region53: #{tpu_custom_call.1} parent=51 // pred_check
          %p1002 = pneg %p134
        $region54: #{tpu_custom_call.1} parent=51 // pred_check_branch
          %1004 = sbr.rel (%p1002) target = $region56
        $region55: #{tpu_custom_call.1} parent=51 // pred_region
          %s1005 = sand.u32 %s119, 1
          %s1006 = scalar_lea.sflag [#allocation4], %s1005
          %s1007 = sand.u32 %s119, 1
          %s1008 = smul.addr %s1007, 128
          %s1009 = scalar_lea.vmem [#allocation7], %s1008
          %1010 = dma.done %s1006, 2048
        $region56: #{tpu_custom_call.1} parent=51 // pred_fallthru
          _
        // Predicated region
        $region57: #{tpu_custom_call.1} parent=51 // pred_check
          %p1011 = pneg %p162
        $region58: #{tpu_custom_call.1} parent=51 // pred_check_branch
          %1013 = sbr.rel (%p1011) target = $region60
        $region59: #{tpu_custom_call.1} parent=51 // pred_region
          %s1014 = sand.u32 %s147, 1
          %s1015 = scalar_lea.sflag [#allocation9], %s1014
          %s1016 = sand.u32 %s147, 1
          %s1017 = smul.addr %s1016, 128
          %s1018 = scalar_lea.vmem [#allocation8], %s1017
          %1019 = dma.done %s1015, 2048
        $region60: #{tpu_custom_call.1} parent=51 // pred_fallthru
          _
      $region52: #{tpu_custom_call.1} parent=5 // pred_fallthru
        _
    $region6: #{tpu_custom_call.1} parent=1 // loop_footer
      %s25 = sadd.s32 1, %s21
    $region7: #{tpu_custom_call.1} parent=1 // loop_footer_branch
      %20 = sbr.rel target = $region3
    $region8: #{tpu_custom_call.1} parent=1 // loop_exit
      _
    %1020 = vsyncpa [#allocation3], 1
    %s1021 = scalar_lea.sflag [#allocation3], 1
    %1022 = vsyncpa %s1021, 1
    %1023 = vsyncpa [#allocation6], 1
    %1024 = vsyncpa [#allocation4], 1
    %s1025 = scalar_lea.sflag [#allocation4], 1
    %1026 = vsyncpa %s1025, 1
    %1027 = vsyncpa [#allocation9], 1
    %s1028 = scalar_lea.sflag [#allocation9], 1
    %1029 = vsyncpa %s1028, 1

</llo_original>
